<compile_context>
chip_gen: v7x
topology: tpu7x:2x2x1
jax: 0.10.0
libtpu: 0.0.40
codegen_flags: <defaults>
</compile_context>

<pallas_src>
import functools

import numpy as np
import jax
import jax.numpy as jnp
from jax import lax
from jax.experimental import pallas as pl
from jax.experimental.pallas import tpu as pltpu

ML = 2.9086   # ml constant from the reference forward
SL = 1.898    # sl constant from the reference forward

# output-slab row indices
_ROW_H, _ROW_C, _ROW_L, _ROW_OO, _ROW_OL, _ROW_F, _ROW_STD = range(7)
_N_OUT_ROWS = 8   # pad to one full sublane group


# ------------------------------ fused kernel --------------------------------
def _fused_kernel(spin_len, train_len, time_lag,
                  u1_ref, u2_ref, yobs_ref, params_ref, out_ref):
    T, B = u1_ref.shape
    f32 = jnp.float32

    # ---- constant (weight-softmax) gates, from the packed param row --------
    p = params_ref[...]                            # (1, 8)
    e = jnp.exp(p)                                 # one vector exp
    e_o = e[:, 0:1]
    e_l = e[:, 1:2]
    e_f = e[:, 2:3]
    den = e_o + e_l + e_f
    oo = e_o / den                                 # (1, 1)
    ol1 = e_l / den                                # (1, 1)
    b0 = p[:, 3:4]
    wb2 = p[:, 4:5]
    # fold b0 + ((u2 - ML)/SL)*wb2 into a single FMA: u2*w_eff + b_eff
    w_eff = wb2 * f32(1.0 / SL)
    b_eff = b0 - wb2 * f32(ML / SL)

    # ---- unbiased std of y_obs[spin_len:train_len] (torch.std, ddof=1) -----
    y = yobs_ref[...]                              # (1, B), batch on lanes
    ysl = y[:, spin_len:train_len]
    n = train_len - spin_len
    mean = jnp.sum(ysl, axis=1, keepdims=True) * f32(1.0 / n)
    d = ysl - mean
    var = jnp.sum(d * d, axis=1, keepdims=True) * f32(1.0 / (n - 1))
    std = jnp.sqrt(var)                            # (1, 1)

    # ---- within-batch affine composition over time (lane-dense rows) -------
    # (A_part, B_part): composition of steps t = 0 .. T-2, i.e. the cell
    # *entering* the final timestep — exactly what the reference stores.
    ones_row = jnp.ones((1, B), f32)
    zeros_row = jnp.zeros((1, B), f32)

    def t_body(t, carry):
        A, Bv = carry
        u1_t = u1_ref[pl.ds(t, 1), :]              # (1, B) sublane row
        u2_t = u2_ref[pl.ds(t, 1), :]
        ol_t = ol1 * jax.nn.sigmoid(u2_t * w_eff + b_eff)
        f_t = 1.0 - oo - ol_t
        return (f_t * A, f_t * Bv + u1_t)

    A_part, B_part = lax.fori_loop(
        0, T - 1, t_body, (ones_row, zeros_row),
        unroll=min(8, max(1, T - 1)))

    # final timestep: its gates are the reported Gate_ol / Gate_f
    u1_last = u1_ref[pl.ds(T - 1, 1), :]
    u2_last = u2_ref[pl.ds(T - 1, 1), :]
    ol_last = ol1 * jax.nn.sigmoid(u2_last * w_eff + b_eff)
    f_last = 1.0 - oo - ol_last
    A_full = f_last * A_part                       # composition of t = 0 .. T-1
    B_full = f_last * B_part + u1_last

    # ---- cross-batch serial chain (length B - time_lag) --------------------
    lane_ids = lax.broadcasted_iota(jnp.int32, (1, B), 1)

    def b_body(b, carry):
        c_in, c_prev = carry                       # (1,1), (1,B)
        hot = lane_ids == b
        a_p = jnp.sum(jnp.where(hot, A_part, 0.0), axis=1, keepdims=True)
        b_p = jnp.sum(jnp.where(hot, B_part, 0.0), axis=1, keepdims=True)
        a_f = jnp.sum(jnp.where(hot, A_full, 0.0), axis=1, keepdims=True)
        b_f = jnp.sum(jnp.where(hot, B_full, 0.0), axis=1, keepdims=True)
        c_b = a_p * c_in + b_p                     # cell entering last timestep
        c_prev = c_prev + jnp.where(hot, c_b, 0.0)
        c_in = a_f * c_in + b_f                    # carry into next batch elem
        return (c_in, c_prev)

    _, c_prev = lax.fori_loop(
        time_lag, B, b_body, (jnp.zeros((1, 1), f32), zeros_row))

    # ---- single lane-dense output slab --------------------------------------
    sel = (lane_ids >= time_lag).astype(f32)       # rows b < time_lag stay 0
    out_ref[...] = jnp.concatenate(
        [oo * c_prev,          # h_n  (= h_0 + bp_0, bp_0 == 0, ib == 0)
         c_prev,               # c_n
         ol_last * c_prev,     # l_n
         sel * oo,             # Gate_oo
         sel * ol_last,        # Gate_ol
         sel * f_last,         # Gate_f
         sel * std,            # obs_std
         zeros_row],           # padding row
        axis=0)


# -------------------------------- wrapper -----------------------------------
def mcpbrnn_forward(x, y_obs, params, *, time_lag, spin_len, train_len):
    B, T, _ = x.shape
    assert train_len - spin_len >= 2, "need >= 2 samples for unbiased std"

    xt = jnp.transpose(x.astype(jnp.float32), (1, 0, 2))    # (T, B, I): scan order
    u1 = xt[:, :, 0]                                         # (T, B): time->sublanes
    u2 = xt[:, :, 1]
    yobs = y_obs.astype(jnp.float32).reshape(1, B)           # batch on lanes

    def scalar(name):
        return jnp.asarray(params[name], jnp.float32).reshape(())

    zero = jnp.zeros((), jnp.float32)
    packed = jnp.stack([scalar("weight_r_yom"), scalar("weight_r_ylm"),
                        scalar("weight_r_yfm"), scalar("bias_b0_ylm"),
                        scalar("weight_b2_ylm"), zero, zero, zero]).reshape(1, 8)

    vmem = pl.BlockSpec(memory_space=pltpu.MemorySpace.VMEM)
    in_bytes = 4 * (2 * T * B + B + 8)
    out_bytes = 4 * _N_OUT_ROWS * B
    cost = pl.CostEstimate(flops=10 * B * T + 16 * B,
                           transcendentals=B * T + B + 16,
                           bytes_accessed=in_bytes + out_bytes)
    vmem_limit = int(min(max(6 * (in_bytes + out_bytes), 16 * 2**20), 48 * 2**20))

    kernel = functools.partial(_fused_kernel, spin_len, train_len, time_lag)
    slab = pl.pallas_call(
        kernel,
        out_shape=jax.ShapeDtypeStruct((_N_OUT_ROWS, B), jnp.float32),
        in_specs=[vmem, vmem, vmem, vmem],
        out_specs=vmem,
        compiler_params=pltpu.CompilerParams(vmem_limit_bytes=vmem_limit),
        cost_estimate=cost,
    )(u1, u2, yobs, packed)

    def row(i):
        return slab[i].reshape(B, 1)

    h_n = row(_ROW_H)
    c_n = row(_ROW_C)
    l_n = row(_ROW_L)
    gate_oo = row(_ROW_OO)
    gate_ol = row(_ROW_OL)
    gate_f = row(_ROW_F)
    obs_std = row(_ROW_STD)
    zeros_b = jnp.zeros((B, 1), jnp.float32)
    bp_n = zeros_b            # identically zero in the reference (ib == 0)
    gate_ib = zeros_b
    h_nout = jnp.concatenate([h_n, obs_std], axis=1)
    return (h_n, c_n, l_n, bp_n, gate_ib, gate_oo, gate_ol, gate_f,
            h_nout, obs_std)


# --------------------------- numpy reference --------------------------------
def _reference_numpy(x, y_obs, w, time_lag, spin_len, train_len):
    x = x.astype(np.float32)
    y_obs = y_obs.astype(np.float32)
    B, T, _ = x.shape
    xs = np.transpose(x, (1, 0, 2))
    H = 1
    h_n = np.zeros((B, H), np.float32); c_n = np.zeros((B, H), np.float32)
    l_n = np.zeros((B, H), np.float32); bp_n = np.zeros((B, H), np.float32)
    gib = np.zeros((B, H), np.float32); goo = np.zeros((B, H), np.float32)
    gol = np.zeros((B, H), np.float32); gf = np.zeros((B, H), np.float32)
    obs_std = np.zeros((B, H), np.float32)
    e_o = np.exp(w["weight_r_yom"]); e_l = np.exp(w["weight_r_ylm"]); e_f = np.exp(w["weight_r_yfm"])
    den = e_o + e_l + e_f
    oo = e_o / den
    ol1 = e_l / den
    obsstd = np.std(y_obs[spin_len:train_len], ddof=1)
    c0 = np.float32(0.0)
    for b in range(time_lag, B):
        for t in range(T):
            u1 = xs[t, b, 0]; u2 = xs[t, b, 1]
            z = w["bias_b0_ylm"] + ((u2 - ML) / SL) * w["weight_b2_ylm"]
            ol = ol1 / (1.0 + np.exp(-z))
            fgate = 1.0 - oo - ol
            c1 = fgate * c0 + u1
            h_n[b, 0] = oo * c0
            c_n[b, 0] = c0
            l_n[b, 0] = ol * c0
            goo[b, 0] = oo
            gol[b, 0] = ol
            gf[b, 0] = fgate
            obs_std[b, 0] = obsstd
            c0 = c1
    h_nout = np.concatenate([h_n, obs_std], axis=1)
    return (h_n, c_n, l_n, bp_n, gib, goo, gol, gf, h_nout, obs_std)


if __name__ == "__main__":
    B, T, I = 8, 8, 2          # batch, seq, input_size
    spin_len, train_len, time_lag = 2, 6, 1

    key = jax.random.PRNGKey(0)
    k_x, k_y, k_p = jax.random.split(key, 3)
    x = jax.random.normal(k_x, (B, T, I), dtype=jnp.float32)
    y_obs = jax.random.normal(k_y, (B, 1), dtype=jnp.float32)

    pk = jax.random.split(k_p, 5)
    params = {
        "weight_r_yom": jax.random.uniform(pk[0], (1, 1), jnp.float32),
        "weight_r_ylm": jax.random.uniform(pk[1], (1, 1), jnp.float32),
        "weight_r_yfm": jax.random.uniform(pk[2], (1, 1), jnp.float32),
        "bias_b0_ylm": jax.random.uniform(pk[3], (1,), jnp.float32),
        "weight_b2_ylm": jax.random.uniform(pk[4], (1, 1), jnp.float32),
    }

    outs = mcpbrnn_forward(x, y_obs, params,
                           time_lag=time_lag, spin_len=spin_len, train_len=train_len)
    outs = jax.block_until_ready(outs)

    ref = _reference_numpy(
        np.asarray(x), np.asarray(y_obs),
        {k: float(np.asarray(v).reshape(-1)[0]) for k, v in params.items()},
        time_lag, spin_len, train_len)

    names = ["h_n", "c_n", "l_n", "bp_n", "Gate_ib", "Gate_oo", "Gate_ol",
             "Gate_f", "h_nout", "obs_std"]
    for name, got, want in zip(names, outs, ref):
        np.testing.assert_allclose(np.asarray(got), want, rtol=1e-4, atol=1e-4,
                                   err_msg=name)
    print("KERNEL_OK")
</pallas_src>

<mosaic_0001>
module attributes {stable_mosaic.version = 11 : i64} {
  func.func @_fused_kernel(%arg0: memref<8x8xf32, #tpu.memory_space<vmem>>, %arg1: memref<8x8xf32, #tpu.memory_space<vmem>>, %arg2: memref<1x8xf32, #tpu.memory_space<vmem>>, %arg3: memref<1x8xf32, #tpu.memory_space<vmem>>, %arg4: memref<8x8xf32, #tpu.memory_space<vmem>>) attributes {dimension_semantics = [], scalar_prefetch = 0 : i64, scratch_operands = 0 : i64, tpu.core_type = #tpu.core_type<tc>} {
    %c0 = arith.constant 0 : index
    %c0_0 = arith.constant 0 : index
    %0 = vector.load %arg3[%c0, %c0_0] : memref<1x8xf32, #tpu.memory_space<vmem>>, vector<1x8xf32>
    %1 = math.exp %0 : vector<1x8xf32>
    %2 = vector.extract_strided_slice %1 {offsets = [0, 0], sizes = [1, 1], strides = [1, 1]} : vector<1x8xf32> to vector<1x1xf32>
    %3 = vector.extract_strided_slice %1 {offsets = [0, 1], sizes = [1, 1], strides = [1, 1]} : vector<1x8xf32> to vector<1x1xf32>
    %4 = vector.extract_strided_slice %1 {offsets = [0, 2], sizes = [1, 1], strides = [1, 1]} : vector<1x8xf32> to vector<1x1xf32>
    %5 = arith.addf %2, %3 : vector<1x1xf32>
    %6 = arith.addf %5, %4 : vector<1x1xf32>
    %7 = arith.divf %2, %6 : vector<1x1xf32>
    %8 = arith.divf %3, %6 : vector<1x1xf32>
    %9 = vector.extract_strided_slice %0 {offsets = [0, 3], sizes = [1, 1], strides = [1, 1]} : vector<1x8xf32> to vector<1x1xf32>
    %10 = vector.extract_strided_slice %0 {offsets = [0, 4], sizes = [1, 1], strides = [1, 1]} : vector<1x8xf32> to vector<1x1xf32>
    %cst = arith.constant 0.52687037 : f32
    %11 = vector.broadcast %cst : f32 to vector<1x1xf32>
    %12 = arith.mulf %10, %11 : vector<1x1xf32>
    %cst_1 = arith.constant 1.53245521 : f32
    %13 = vector.broadcast %cst_1 : f32 to vector<1x1xf32>
    %14 = arith.mulf %10, %13 : vector<1x1xf32>
    %15 = arith.subf %9, %14 : vector<1x1xf32>
    %c0_2 = arith.constant 0 : index
    %c0_3 = arith.constant 0 : index
    %16 = vector.load %arg2[%c0_2, %c0_3] : memref<1x8xf32, #tpu.memory_space<vmem>>, vector<1x8xf32>
    %17 = vector.extract_strided_slice %16 {offsets = [0, 2], sizes = [1, 4], strides = [1, 1]} : vector<1x8xf32> to vector<1x4xf32>
    %cst_4 = arith.constant dense<0.000000e+00> : vector<1xf32>
    %18 = vector.multi_reduction <add>, %17, %cst_4 [1] : vector<1x4xf32> to vector<1xf32>
    %19 = vector.shape_cast %18 : vector<1xf32> to vector<1x1xf32>
    %cst_5 = arith.constant 2.500000e-01 : f32
    %20 = vector.broadcast %cst_5 : f32 to vector<1x1xf32>
    %21 = arith.mulf %19, %20 : vector<1x1xf32>
    %22 = vector.broadcast %21 : vector<1x1xf32> to vector<1x4xf32>
    %23 = arith.subf %17, %22 : vector<1x4xf32>
    %24 = arith.mulf %23, %23 : vector<1x4xf32>
    %cst_6 = arith.constant dense<0.000000e+00> : vector<1xf32>
    %25 = vector.multi_reduction <add>, %24, %cst_6 [1] : vector<1x4xf32> to vector<1xf32>
    %26 = vector.shape_cast %25 : vector<1xf32> to vector<1x1xf32>
    %cst_7 = arith.constant 0.333333343 : f32
    %27 = vector.broadcast %cst_7 : f32 to vector<1x1xf32>
    %28 = arith.mulf %26, %27 : vector<1x1xf32>
    %29 = math.sqrt %28 : vector<1x1xf32>
    %cst_8 = arith.constant 1.000000e+00 : f32
    %30 = vector.broadcast %cst_8 : f32 to vector<1x8xf32>
    %cst_9 = arith.constant 0.000000e+00 : f32
    %31 = vector.broadcast %cst_9 : f32 to vector<1x8xf32>
    %c0_i32 = arith.constant 0 : i32
    %32 = arith.index_cast %c0_i32 : i32 to index
    %c0_10 = arith.constant 0 : index
    %33 = vector.load %arg0[%32, %c0_10] : memref<8x8xf32, #tpu.memory_space<vmem>>, vector<1x8xf32>
    %34 = arith.index_cast %c0_i32 : i32 to index
    %c0_11 = arith.constant 0 : index
    %35 = vector.load %arg1[%34, %c0_11] : memref<8x8xf32, #tpu.memory_space<vmem>>, vector<1x8xf32>
    %36 = vector.broadcast %12 : vector<1x1xf32> to vector<1x8xf32>
    %37 = arith.mulf %35, %36 : vector<1x8xf32>
    %38 = vector.broadcast %15 : vector<1x1xf32> to vector<1x8xf32>
    %39 = arith.addf %37, %38 : vector<1x8xf32>
    %40 = arith.negf %39 : vector<1x8xf32>
    %41 = math.exp %40 : vector<1x8xf32>
    %cst_12 = arith.constant 1.000000e+00 : f32
    %42 = vector.broadcast %cst_12 : f32 to vector<1x8xf32>
    %43 = arith.addf %42, %41 : vector<1x8xf32>
    %44 = arith.divf %42, %43 : vector<1x8xf32>
    %45 = vector.broadcast %8 : vector<1x1xf32> to vector<1x8xf32>
    %46 = arith.mulf %45, %44 : vector<1x8xf32>
    %cst_13 = arith.constant 1.000000e+00 : f32
    %47 = vector.broadcast %cst_13 : f32 to vector<1x1xf32>
    %48 = arith.subf %47, %7 : vector<1x1xf32>
    %49 = vector.broadcast %48 : vector<1x1xf32> to vector<1x8xf32>
    %50 = arith.subf %49, %46 : vector<1x8xf32>
    %51 = arith.mulf %50, %30 : vector<1x8xf32>
    %52 = arith.mulf %50, %31 : vector<1x8xf32>
    %53 = arith.addf %52, %33 : vector<1x8xf32>
    %c1_i32 = arith.constant 1 : i32
    %54 = arith.index_cast %c1_i32 : i32 to index
    %c0_14 = arith.constant 0 : index
    %55 = vector.load %arg0[%54, %c0_14] : memref<8x8xf32, #tpu.memory_space<vmem>>, vector<1x8xf32>
    %56 = arith.index_cast %c1_i32 : i32 to index
    %c0_15 = arith.constant 0 : index
    %57 = vector.load %arg1[%56, %c0_15] : memref<8x8xf32, #tpu.memory_space<vmem>>, vector<1x8xf32>
    %58 = vector.broadcast %12 : vector<1x1xf32> to vector<1x8xf32>
    %59 = arith.mulf %57, %58 : vector<1x8xf32>
    %60 = vector.broadcast %15 : vector<1x1xf32> to vector<1x8xf32>
    %61 = arith.addf %59, %60 : vector<1x8xf32>
    %62 = arith.negf %61 : vector<1x8xf32>
    %63 = math.exp %62 : vector<1x8xf32>
    %cst_16 = arith.constant 1.000000e+00 : f32
    %64 = vector.broadcast %cst_16 : f32 to vector<1x8xf32>
    %65 = arith.addf %64, %63 : vector<1x8xf32>
    %66 = arith.divf %64, %65 : vector<1x8xf32>
    %67 = vector.broadcast %8 : vector<1x1xf32> to vector<1x8xf32>
    %68 = arith.mulf %67, %66 : vector<1x8xf32>
    %cst_17 = arith.constant 1.000000e+00 : f32
    %69 = vector.broadcast %cst_17 : f32 to vector<1x1xf32>
    %70 = arith.subf %69, %7 : vector<1x1xf32>
    %71 = vector.broadcast %70 : vector<1x1xf32> to vector<1x8xf32>
    %72 = arith.subf %71, %68 : vector<1x8xf32>
    %73 = arith.mulf %72, %51 : vector<1x8xf32>
    %74 = arith.mulf %72, %53 : vector<1x8xf32>
    %75 = arith.addf %74, %55 : vector<1x8xf32>
    %c2_i32 = arith.constant 2 : i32
    %76 = arith.index_cast %c2_i32 : i32 to index
    %c0_18 = arith.constant 0 : index
    %77 = vector.load %arg0[%76, %c0_18] : memref<8x8xf32, #tpu.memory_space<vmem>>, vector<1x8xf32>
    %78 = arith.index_cast %c2_i32 : i32 to index
    %c0_19 = arith.constant 0 : index
    %79 = vector.load %arg1[%78, %c0_19] : memref<8x8xf32, #tpu.memory_space<vmem>>, vector<1x8xf32>
    %80 = vector.broadcast %12 : vector<1x1xf32> to vector<1x8xf32>
    %81 = arith.mulf %79, %80 : vector<1x8xf32>
    %82 = vector.broadcast %15 : vector<1x1xf32> to vector<1x8xf32>
    %83 = arith.addf %81, %82 : vector<1x8xf32>
    %84 = arith.negf %83 : vector<1x8xf32>
    %85 = math.exp %84 : vector<1x8xf32>
    %cst_20 = arith.constant 1.000000e+00 : f32
    %86 = vector.broadcast %cst_20 : f32 to vector<1x8xf32>
    %87 = arith.addf %86, %85 : vector<1x8xf32>
    %88 = arith.divf %86, %87 : vector<1x8xf32>
    %89 = vector.broadcast %8 : vector<1x1xf32> to vector<1x8xf32>
    %90 = arith.mulf %89, %88 : vector<1x8xf32>
    %cst_21 = arith.constant 1.000000e+00 : f32
    %91 = vector.broadcast %cst_21 : f32 to vector<1x1xf32>
    %92 = arith.subf %91, %7 : vector<1x1xf32>
    %93 = vector.broadcast %92 : vector<1x1xf32> to vector<1x8xf32>
    %94 = arith.subf %93, %90 : vector<1x8xf32>
    %95 = arith.mulf %94, %73 : vector<1x8xf32>
    %96 = arith.mulf %94, %75 : vector<1x8xf32>
    %97 = arith.addf %96, %77 : vector<1x8xf32>
    %c3_i32 = arith.constant 3 : i32
    %98 = arith.index_cast %c3_i32 : i32 to index
    %c0_22 = arith.constant 0 : index
    %99 = vector.load %arg0[%98, %c0_22] : memref<8x8xf32, #tpu.memory_space<vmem>>, vector<1x8xf32>
    %100 = arith.index_cast %c3_i32 : i32 to index
    %c0_23 = arith.constant 0 : index
    %101 = vector.load %arg1[%100, %c0_23] : memref<8x8xf32, #tpu.memory_space<vmem>>, vector<1x8xf32>
    %102 = vector.broadcast %12 : vector<1x1xf32> to vector<1x8xf32>
    %103 = arith.mulf %101, %102 : vector<1x8xf32>
    %104 = vector.broadcast %15 : vector<1x1xf32> to vector<1x8xf32>
    %105 = arith.addf %103, %104 : vector<1x8xf32>
    %106 = arith.negf %105 : vector<1x8xf32>
    %107 = math.exp %106 : vector<1x8xf32>
    %cst_24 = arith.constant 1.000000e+00 : f32
    %108 = vector.broadcast %cst_24 : f32 to vector<1x8xf32>
    %109 = arith.addf %108, %107 : vector<1x8xf32>
    %110 = arith.divf %108, %109 : vector<1x8xf32>
    %111 = vector.broadcast %8 : vector<1x1xf32> to vector<1x8xf32>
    %112 = arith.mulf %111, %110 : vector<1x8xf32>
    %cst_25 = arith.constant 1.000000e+00 : f32
    %113 = vector.broadcast %cst_25 : f32 to vector<1x1xf32>
    %114 = arith.subf %113, %7 : vector<1x1xf32>
    %115 = vector.broadcast %114 : vector<1x1xf32> to vector<1x8xf32>
    %116 = arith.subf %115, %112 : vector<1x8xf32>
    %117 = arith.mulf %116, %95 : vector<1x8xf32>
    %118 = arith.mulf %116, %97 : vector<1x8xf32>
    %119 = arith.addf %118, %99 : vector<1x8xf32>
    %c4_i32 = arith.constant 4 : i32
    %120 = arith.index_cast %c4_i32 : i32 to index
    %c0_26 = arith.constant 0 : index
    %121 = vector.load %arg0[%120, %c0_26] : memref<8x8xf32, #tpu.memory_space<vmem>>, vector<1x8xf32>
    %122 = arith.index_cast %c4_i32 : i32 to index
    %c0_27 = arith.constant 0 : index
    %123 = vector.load %arg1[%122, %c0_27] : memref<8x8xf32, #tpu.memory_space<vmem>>, vector<1x8xf32>
    %124 = vector.broadcast %12 : vector<1x1xf32> to vector<1x8xf32>
    %125 = arith.mulf %123, %124 : vector<1x8xf32>
    %126 = vector.broadcast %15 : vector<1x1xf32> to vector<1x8xf32>
    %127 = arith.addf %125, %126 : vector<1x8xf32>
    %128 = arith.negf %127 : vector<1x8xf32>
    %129 = math.exp %128 : vector<1x8xf32>
    %cst_28 = arith.constant 1.000000e+00 : f32
    %130 = vector.broadcast %cst_28 : f32 to vector<1x8xf32>
    %131 = arith.addf %130, %129 : vector<1x8xf32>
    %132 = arith.divf %130, %131 : vector<1x8xf32>
    %133 = vector.broadcast %8 : vector<1x1xf32> to vector<1x8xf32>
    %134 = arith.mulf %133, %132 : vector<1x8xf32>
    %cst_29 = arith.constant 1.000000e+00 : f32
    %135 = vector.broadcast %cst_29 : f32 to vector<1x1xf32>
    %136 = arith.subf %135, %7 : vector<1x1xf32>
    %137 = vector.broadcast %136 : vector<1x1xf32> to vector<1x8xf32>
    %138 = arith.subf %137, %134 : vector<1x8xf32>
    %139 = arith.mulf %138, %117 : vector<1x8xf32>
    %140 = arith.mulf %138, %119 : vector<1x8xf32>
    %141 = arith.addf %140, %121 : vector<1x8xf32>
    %c5_i32 = arith.constant 5 : i32
    %142 = arith.index_cast %c5_i32 : i32 to index
    %c0_30 = arith.constant 0 : index
    %143 = vector.load %arg0[%142, %c0_30] : memref<8x8xf32, #tpu.memory_space<vmem>>, vector<1x8xf32>
    %144 = arith.index_cast %c5_i32 : i32 to index
    %c0_31 = arith.constant 0 : index
    %145 = vector.load %arg1[%144, %c0_31] : memref<8x8xf32, #tpu.memory_space<vmem>>, vector<1x8xf32>
    %146 = vector.broadcast %12 : vector<1x1xf32> to vector<1x8xf32>
    %147 = arith.mulf %145, %146 : vector<1x8xf32>
    %148 = vector.broadcast %15 : vector<1x1xf32> to vector<1x8xf32>
    %149 = arith.addf %147, %148 : vector<1x8xf32>
    %150 = arith.negf %149 : vector<1x8xf32>
    %151 = math.exp %150 : vector<1x8xf32>
    %cst_32 = arith.constant 1.000000e+00 : f32
    %152 = vector.broadcast %cst_32 : f32 to vector<1x8xf32>
    %153 = arith.addf %152, %151 : vector<1x8xf32>
    %154 = arith.divf %152, %153 : vector<1x8xf32>
    %155 = vector.broadcast %8 : vector<1x1xf32> to vector<1x8xf32>
    %156 = arith.mulf %155, %154 : vector<1x8xf32>
    %cst_33 = arith.constant 1.000000e+00 : f32
    %157 = vector.broadcast %cst_33 : f32 to vector<1x1xf32>
    %158 = arith.subf %157, %7 : vector<1x1xf32>
    %159 = vector.broadcast %158 : vector<1x1xf32> to vector<1x8xf32>
    %160 = arith.subf %159, %156 : vector<1x8xf32>
    %161 = arith.mulf %160, %139 : vector<1x8xf32>
    %162 = arith.mulf %160, %141 : vector<1x8xf32>
    %163 = arith.addf %162, %143 : vector<1x8xf32>
    %c6_i32 = arith.constant 6 : i32
    %164 = arith.index_cast %c6_i32 : i32 to index
    %c0_34 = arith.constant 0 : index
    %165 = vector.load %arg0[%164, %c0_34] : memref<8x8xf32, #tpu.memory_space<vmem>>, vector<1x8xf32>
    %166 = arith.index_cast %c6_i32 : i32 to index
    %c0_35 = arith.constant 0 : index
    %167 = vector.load %arg1[%166, %c0_35] : memref<8x8xf32, #tpu.memory_space<vmem>>, vector<1x8xf32>
    %168 = vector.broadcast %12 : vector<1x1xf32> to vector<1x8xf32>
    %169 = arith.mulf %167, %168 : vector<1x8xf32>
    %170 = vector.broadcast %15 : vector<1x1xf32> to vector<1x8xf32>
    %171 = arith.addf %169, %170 : vector<1x8xf32>
    %172 = arith.negf %171 : vector<1x8xf32>
    %173 = math.exp %172 : vector<1x8xf32>
    %cst_36 = arith.constant 1.000000e+00 : f32
    %174 = vector.broadcast %cst_36 : f32 to vector<1x8xf32>
    %175 = arith.addf %174, %173 : vector<1x8xf32>
    %176 = arith.divf %174, %175 : vector<1x8xf32>
    %177 = vector.broadcast %8 : vector<1x1xf32> to vector<1x8xf32>
    %178 = arith.mulf %177, %176 : vector<1x8xf32>
    %cst_37 = arith.constant 1.000000e+00 : f32
    %179 = vector.broadcast %cst_37 : f32 to vector<1x1xf32>
    %180 = arith.subf %179, %7 : vector<1x1xf32>
    %181 = vector.broadcast %180 : vector<1x1xf32> to vector<1x8xf32>
    %182 = arith.subf %181, %178 : vector<1x8xf32>
    %183 = arith.mulf %182, %161 : vector<1x8xf32>
    %184 = arith.mulf %182, %163 : vector<1x8xf32>
    %185 = arith.addf %184, %165 : vector<1x8xf32>
    %c7_i32 = arith.constant 7 : i32
    %c7 = arith.constant 7 : index
    %c0_38 = arith.constant 0 : index
    %186 = vector.load %arg0[%c7, %c0_38] : memref<8x8xf32, #tpu.memory_space<vmem>>, vector<1x8xf32>
    %c7_39 = arith.constant 7 : index
    %c0_40 = arith.constant 0 : index
    %187 = vector.load %arg1[%c7_39, %c0_40] : memref<8x8xf32, #tpu.memory_space<vmem>>, vector<1x8xf32>
    %188 = vector.broadcast %12 : vector<1x1xf32> to vector<1x8xf32>
    %189 = arith.mulf %187, %188 : vector<1x8xf32>
    %190 = vector.broadcast %15 : vector<1x1xf32> to vector<1x8xf32>
    %191 = arith.addf %189, %190 : vector<1x8xf32>
    %192 = arith.negf %191 : vector<1x8xf32>
    %193 = math.exp %192 : vector<1x8xf32>
    %cst_41 = arith.constant 1.000000e+00 : f32
    %194 = vector.broadcast %cst_41 : f32 to vector<1x8xf32>
    %195 = arith.addf %194, %193 : vector<1x8xf32>
    %196 = arith.divf %194, %195 : vector<1x8xf32>
    %197 = vector.broadcast %8 : vector<1x1xf32> to vector<1x8xf32>
    %198 = arith.mulf %197, %196 : vector<1x8xf32>
    %cst_42 = arith.constant 1.000000e+00 : f32
    %199 = vector.broadcast %cst_42 : f32 to vector<1x1xf32>
    %200 = arith.subf %199, %7 : vector<1x1xf32>
    %201 = vector.broadcast %200 : vector<1x1xf32> to vector<1x8xf32>
    %202 = arith.subf %201, %198 : vector<1x8xf32>
    %203 = arith.mulf %202, %183 : vector<1x8xf32>
    %204 = arith.mulf %202, %185 : vector<1x8xf32>
    %205 = arith.addf %204, %186 : vector<1x8xf32>
    %206 = tpu.iota {dimensions = array<i32: 1>} : vector<1x8xi32>
    %cst_43 = arith.constant 0.000000e+00 : f32
    %207 = vector.broadcast %cst_43 : f32 to vector<1x1xf32>
    %c1_i32_44 = arith.constant 1 : i32
    %c7_i32_45 = arith.constant 7 : i32
    %208 = arith.addi %c1_i32_44, %c7_i32_45 : i32
    %c1_i32_46 = arith.constant 1 : i32
    %209:2 = scf.for %arg5 = %c1_i32_44 to %208 step %c1_i32_46 iter_args(%arg6 = %207, %arg7 = %31) -> (vector<1x1xf32>, vector<1x8xf32>)  : i32 {
      %225 = vector.broadcast %arg5 : i32 to vector<1x8xi32>
      %226 = arith.cmpi eq, %206, %225 : vector<1x8xi32>
      %cst_51 = arith.constant 0.000000e+00 : f32
      %227 = vector.broadcast %cst_51 : f32 to vector<1x8xf32>
      %228 = arith.select %226, %183, %227 : vector<1x8xi1>, vector<1x8xf32>
      %cst_52 = arith.constant dense<0.000000e+00> : vector<1xf32>
      %229 = vector.multi_reduction <add>, %228, %cst_52 [1] : vector<1x8xf32> to vector<1xf32>
      %230 = vector.shape_cast %229 : vector<1xf32> to vector<1x1xf32>
      %cst_53 = arith.constant 0.000000e+00 : f32
      %231 = vector.broadcast %cst_53 : f32 to vector<1x8xf32>
      %232 = arith.select %226, %185, %231 : vector<1x8xi1>, vector<1x8xf32>
      %cst_54 = arith.constant dense<0.000000e+00> : vector<1xf32>
      %233 = vector.multi_reduction <add>, %232, %cst_54 [1] : vector<1x8xf32> to vector<1xf32>
      %234 = vector.shape_cast %233 : vector<1xf32> to vector<1x1xf32>
      %cst_55 = arith.constant 0.000000e+00 : f32
      %235 = vector.broadcast %cst_55 : f32 to vector<1x8xf32>
      %236 = arith.select %226, %203, %235 : vector<1x8xi1>, vector<1x8xf32>
      %cst_56 = arith.constant dense<0.000000e+00> : vector<1xf32>
      %237 = vector.multi_reduction <add>, %236, %cst_56 [1] : vector<1x8xf32> to vector<1xf32>
      %238 = vector.shape_cast %237 : vector<1xf32> to vector<1x1xf32>
      %cst_57 = arith.constant 0.000000e+00 : f32
      %239 = vector.broadcast %cst_57 : f32 to vector<1x8xf32>
      %240 = arith.select %226, %205, %239 : vector<1x8xi1>, vector<1x8xf32>
      %cst_58 = arith.constant dense<0.000000e+00> : vector<1xf32>
      %241 = vector.multi_reduction <add>, %240, %cst_58 [1] : vector<1x8xf32> to vector<1xf32>
      %242 = vector.shape_cast %241 : vector<1xf32> to vector<1x1xf32>
      %243 = arith.mulf %230, %arg6 : vector<1x1xf32>
      %244 = arith.addf %243, %234 : vector<1x1xf32>
      %cst_59 = arith.constant 0.000000e+00 : f32
      %245 = vector.shape_cast %244 : vector<1x1xf32> to vector<1x1xf32>
      %246 = vector.broadcast %245 : vector<1x1xf32> to vector<1x8xf32>
      %247 = vector.broadcast %cst_59 : f32 to vector<1x8xf32>
      %248 = arith.select %226, %246, %247 : vector<1x8xi1>, vector<1x8xf32>
      %249 = arith.addf %arg7, %248 : vector<1x8xf32>
      %250 = arith.mulf %238, %arg6 : vector<1x1xf32>
      %251 = arith.addf %250, %242 : vector<1x1xf32>
      scf.yield %251, %249 : vector<1x1xf32>, vector<1x8xf32>
    }
    %c7_i32_47 = arith.constant 7 : i32
    %c1_i32_48 = arith.constant 1 : i32
    %210 = vector.broadcast %c1_i32_48 : i32 to vector<1x8xi32>
    %211 = arith.cmpi sge, %206, %210 : vector<1x8xi32>
    %212 = arith.extui %211 : vector<1x8xi1> to vector<1x8xi32>
    %213 = arith.sitofp %212 : vector<1x8xi32> to vector<1x8xf32>
    %214 = vector.broadcast %7 : vector<1x1xf32> to vector<1x8xf32>
    %215 = arith.mulf %214, %209#1 : vector<1x8xf32>
    %216 = arith.mulf %198, %209#1 : vector<1x8xf32>
    %217 = vector.broadcast %7 : vector<1x1xf32> to vector<1x8xf32>
    %218 = arith.mulf %213, %217 : vector<1x8xf32>
    %219 = arith.mulf %213, %198 : vector<1x8xf32>
    %220 = arith.mulf %213, %202 : vector<1x8xf32>
    %221 = vector.broadcast %29 : vector<1x1xf32> to vector<1x8xf32>
    %222 = arith.mulf %213, %221 : vector<1x8xf32>
    %223 = tpu.concatenate %215, %209#1, %216, %218, %219, %220, %222, %31 in 0 : vector<1x8xf32>, vector<1x8xf32>, vector<1x8xf32>, vector<1x8xf32>, vector<1x8xf32>, vector<1x8xf32>, vector<1x8xf32>, vector<1x8xf32> -> vector<8x8xf32>
    %c0_49 = arith.constant 0 : index
    %c0_50 = arith.constant 0 : index
    %224 = vector.load %arg4[%c0_49, %c0_50] : memref<8x8xf32, #tpu.memory_space<vmem>>, vector<8x8xf32>
    tpu.vector_store %arg4[%c0_49, %c0_50], %223 {strides = array<i32>} : memref<8x8xf32, #tpu.memory_space<vmem>>, vector<8x8xf32>,
    return
  }
}

</mosaic_0001>

<llo_original>
// kernel: tpu_custom_call.1
$region0: #{tpu_custom_call.1}
  #allocation0 [shape = 'u32[]', space=smem, size = 0x4, offset = 0x4, fixed_abs, tag = 'smem constant byte address 0x4 - core index']
  #allocation1 [shape = 'u32[144,128]{1,0:T(1,128)}', space=vmem, size = 0x12000, scoped, tag = 'internal scratch']
  %s0 = inlined_call_operand.hbm [shape: f32[8,8], index: 0, kind: input, shape index: {}]
  %s1 = inlined_call_operand.hbm [shape: f32[8,8], index: 1, kind: input, shape index: {}]
  %s2 = inlined_call_operand.vmem [shape: f32[1,8], index: 2, kind: input, shape index: {}]
  %s3 = inlined_call_operand.vmem [shape: f32[1,8], index: 3, kind: input, shape index: {}]
  %s4 = inlined_call_operand.hbm [shape: f32[8,8], index: 4, kind: output, shape index: {}]
  %s5 = sld [smem:[#allocation0]]
  $region41: #{tpu_custom_call.1} parent=0
    _
  %s7 = ssub.s32 1, %s5
  %s8 = scalar_select 0, %s7, %s5
  $region1: #{tpu_custom_call.1} parent=0
    #allocation2 [shape = 'u8[4096]{0}', space=vmem, size = 0x1000, scoped, tag = 'input window, operand 0, single buffered']
    #allocation3 [shape = 's32[1]{0}', space=sflag, size = 0x4, scoped, tag = 'scoped memory for tpu_custom_call.1']
    #allocation4 [shape = 's32[1]{0}', space=sflag, size = 0x4, scoped, tag = 'scoped memory for tpu_custom_call.1']
    #allocation5 [shape = 'u8[4096]{0}', space=vmem, size = 0x1000, scoped, tag = 'input window, operand 1, single buffered']
    #allocation6 [shape = 's32[1]{0}', space=sflag, size = 0x4, scoped, tag = 'scoped memory for tpu_custom_call.1']
    #allocation7 [shape = 'u8[4096]{0}', space=vmem, size = 0x1000, scoped, tag = 'output window, operand 0, single buffered']
    %9 = vsyncpa [#allocation3], 0
    %10 = vsyncpa [#allocation6], 0
    %11 = vsyncpa [#allocation4], 0
    // Predicated region
    $region2: #{tpu_custom_call.1} parent=1 // pred_check
      _
    $region3: #{tpu_custom_call.1} parent=1 // pred_check_branch
      %13 = sbr.rel (0) target = $region5
    $region4: #{tpu_custom_call.1} parent=1 // pred_region
      %s15 = ssub.s32 128, 128
      %16 = vsyncadd [#allocation3], %s15
      %s18 = sshll.u32 [#allocation2], 4
      %s19 = int_to_ptr.vmem [resolvable:$true] %s18
      %21 = dma.hbm_to_vmem [thread:$0]  %s0, 128, %s19, [#allocation3]
    $region5: #{tpu_custom_call.1} parent=1 // pred_fallthru
      _
    // Predicated region
    $region6: #{tpu_custom_call.1} parent=1 // pred_check
      _
    $region7: #{tpu_custom_call.1} parent=1 // pred_check_branch
      %23 = sbr.rel (0) target = $region9
    $region8: #{tpu_custom_call.1} parent=1 // pred_region
      %s25 = ssub.s32 128, 128
      %26 = vsyncadd [#allocation6], %s25
      %s28 = sshll.u32 [#allocation5], 4
      %s29 = int_to_ptr.vmem [resolvable:$true] %s28
      %31 = dma.hbm_to_vmem [thread:$0]  %s1, 128, %s29, [#allocation6]
    $region9: #{tpu_custom_call.1} parent=1 // pred_fallthru
      _
    // Predicated region
    $region10: #{tpu_custom_call.1} parent=1 // pred_check
      _
    $region11: #{tpu_custom_call.1} parent=1 // pred_check_branch
      %33 = sbr.rel (0) target = $region13
    $region12: #{tpu_custom_call.1} parent=1 // pred_region
      _
    $region13: #{tpu_custom_call.1} parent=1 // pred_fallthru
      _
    // Predicated region
    $region14: #{tpu_custom_call.1} parent=1 // pred_check
      _
    $region15: #{tpu_custom_call.1} parent=1 // pred_check_branch
      %35 = sbr.rel (0) target = $region17
    $region16: #{tpu_custom_call.1} parent=1 // pred_region
      _
    $region17: #{tpu_custom_call.1} parent=1 // pred_fallthru
      _
    // Predicated region
    $region18: #{tpu_custom_call.1} parent=1 // pred_check
      _
    $region19: #{tpu_custom_call.1} parent=1 // pred_check_branch
      %37 = sbr.rel (0) target = $region21
    $region20: #{tpu_custom_call.1} parent=1 // pred_region
      %38 = dma.done [#allocation3], 128
    $region21: #{tpu_custom_call.1} parent=1 // pred_fallthru
      _
    // Predicated region
    $region22: #{tpu_custom_call.1} parent=1 // pred_check
      _
    $region23: #{tpu_custom_call.1} parent=1 // pred_check_branch
      %40 = sbr.rel (0) target = $region25
    $region24: #{tpu_custom_call.1} parent=1 // pred_region
      %41 = dma.done [#allocation6], 128
    $region25: #{tpu_custom_call.1} parent=1 // pred_fallthru
      _
    %v42 = vld [vmem:[%s3] sm:$0x1]
    %v43 = vmul.f32 %v42, 1.442695
    %v44 = vpow.pop %v43
    %46 = vrot.lane.b32.xlu0 %v44, 127
    %v47 = vpop.permute.xlu0 %46
    %v49 = vadd.f32 %v44, %v47
    %50 = vrot.lane.b32.xlu0 %v44, 126
    %v51 = vpop.permute.xlu0 %50
    %v53 = vadd.f32 %v49, %v51
    %v54 = vrcp.pop %v53
    %v55 = vmul.f32 %v44, %v54
    %57 = vrot.lane.b32.xlu0 %v53, 1
    %v58 = vpop.permute.xlu0 %57
    %v60 = vrcp.pop %v58
    %v61 = vmul.f32 %v44, %v60
    %v62 = vmul.f32 %v42, 0.52687037
    %v63 = vmul.f32 %v42, 1.5324552
    %65 = vrot.lane.b32.xlu0 %v63, 127
    %v66 = vpop.permute.xlu0 %65
    %v68 = vsub.f32 %v42, %v66
    %v69 = vld [vmem:[%s2] sm:$0x1]
    %v71 = vlaneseq
    %v72 = vshrl.u32 %v71, 7
    %v73 = vsub.s32 0, %v72
    %v74 = vrot.slane %v69, %v73
    %75 = vrot.lane.b32.xlu0 %v74, 126
    %v76 = vpop.permute.xlu0 %75
    %vm78 = vcmask 24576
    %v79 = vsel %vm78, %v76, 0.0
    %80 = vadd.xlane.f32.xlu0 %v79
    %v81 = vpop.xlane.xlu0 %80
    %v82 = vmul.f32 %v81, 0.25
    %v83 = vsub.f32 %v69, %v82
    %v84 = vmul.f32 %v83, %v83
    %v86 = vlaneseq
    %v87 = vshrl.u32 %v86, 7
    %v88 = vsub.s32 0, %v87
    %v89 = vrot.slane %v84, %v88
    %90 = vrot.lane.b32.xlu0 %v89, 126
    %v91 = vpop.permute.xlu0 %90
    %v93 = vsel %vm78, %v91, 0.0
    %94 = vadd.xlane.f32.xlu0 %v93
    %v95 = vpop.xlane.xlu0 %94
    %v96 = vmul.f32 %v95, 0.33333334
    %v97 = vrsqrt.pop %v96
    %v98 = vmul.f32 %v96, %v97
    %vm99 = vcmp.eq.f32.partialorder %v96, inf
    %v100 = vsel %vm99, %v96, %v98
    %vm101 = vcmp.eq.f32.partialorder %v96, 0.0
    %v102 = vand.u32 %v96, 2147483648
    %v103 = vsel %vm101, %v102, %v100
    %v104 = vld [vmem:[#allocation2] sm:$0x1]
    %v105 = vld [vmem:[#allocation5] sm:$0x1]
    %107 = vset.pattern.permute.xlu0 4
    %108 = vperm.xlu0 %107, %v62
    %v109 = vpop.permute.xlu0 %108
    %v111 = vlaneseq
    %v112 = vshrl.u32 %v111, 7
    %v113 = vsub.s32 0, %v112
    %v114 = vrot.slane %v109, %v113
    %v115 = vmul.f32 %v105, %v114
    %117 = vset.pattern.permute.xlu0 3
    %118 = vperm.xlu0 %117, %v68
    %v119 = vpop.permute.xlu0 %118
    %v121 = vlaneseq
    %v122 = vshrl.u32 %v121, 7
    %v123 = vsub.s32 0, %v122
    %v124 = vrot.slane %v119, %v123
    %v125 = vadd.f32 %v115, %v124
    %v126 = vxor.u32 %v125, 2147483648
    %v127 = vmul.f32 %v126, 1.442695
    %v128 = vpow.pop %v127
    %v129 = vadd.f32 %v128, 1.0
    %v130 = vrcp.pop %v129
    %v131 = vmul.f32 1.0, %v130
    %133 = vset.pattern.permute.xlu0 1
    %134 = vperm.xlu0 %133, %v61
    %v135 = vpop.permute.xlu0 %134
    %v137 = vlaneseq
    %v138 = vshrl.u32 %v137, 7
    %v139 = vsub.s32 0, %v138
    %v140 = vrot.slane %v135, %v139
    %v141 = vmul.f32 %v140, %v131
    %v142 = vsub.f32 1.0, %v55
    %144 = vset.pattern.permute.xlu0 0
    %145 = vperm.xlu0 %144, %v142
    %v146 = vpop.permute.xlu0 %145
    %v148 = vlaneseq
    %v149 = vshrl.u32 %v148, 7
    %v150 = vsub.s32 0, %v149
    %v151 = vrot.slane %v146, %v150
    %v152 = vsub.f32 %v151, %v141
    %v153 = vmul.f32 %v152, 0.0
    %v154 = vadd.f32 %v153, %v104
    %v155 = vld [vmem:[#allocation2 + $0x1] sm:$0x1]
    %v156 = vld [vmem:[#allocation5 + $0x1] sm:$0x1]
    %v157 = vmul.f32 %v156, %v114
    %v158 = vadd.f32 %v157, %v124
    %v159 = vxor.u32 %v158, 2147483648
    %v160 = vmul.f32 %v159, 1.442695
    %v161 = vpow.pop %v160
    %v162 = vadd.f32 %v161, 1.0
    %v163 = vrcp.pop %v162
    %v164 = vmul.f32 1.0, %v163
    %v165 = vmul.f32 %v140, %v164
    %v166 = vsub.f32 %v151, %v165
    %v167 = vmul.f32 %v166, %v152
    %v168 = vmul.f32 %v166, %v154
    %v169 = vadd.f32 %v168, %v155
    %v170 = vld [vmem:[#allocation2 + $0x2] sm:$0x1]
    %v171 = vld [vmem:[#allocation5 + $0x2] sm:$0x1]
    %v172 = vmul.f32 %v171, %v114
    %v173 = vadd.f32 %v172, %v124
    %v174 = vxor.u32 %v173, 2147483648
    %v175 = vmul.f32 %v174, 1.442695
    %v176 = vpow.pop %v175
    %v177 = vadd.f32 %v176, 1.0
    %v178 = vrcp.pop %v177
    %v179 = vmul.f32 1.0, %v178
    %v180 = vmul.f32 %v140, %v179
    %v181 = vsub.f32 %v151, %v180
    %v182 = vmul.f32 %v181, %v167
    %v183 = vmul.f32 %v181, %v169
    %v184 = vadd.f32 %v183, %v170
    %v185 = vld [vmem:[#allocation2 + $0x3] sm:$0x1]
    %v186 = vld [vmem:[#allocation5 + $0x3] sm:$0x1]
    %v187 = vmul.f32 %v186, %v114
    %v188 = vadd.f32 %v187, %v124
    %v189 = vxor.u32 %v188, 2147483648
    %v190 = vmul.f32 %v189, 1.442695
    %v191 = vpow.pop %v190
    %v192 = vadd.f32 %v191, 1.0
    %v193 = vrcp.pop %v192
    %v194 = vmul.f32 1.0, %v193
    %v195 = vmul.f32 %v140, %v194
    %v196 = vsub.f32 %v151, %v195
    %v197 = vmul.f32 %v196, %v182
    %v198 = vmul.f32 %v196, %v184
    %v199 = vadd.f32 %v198, %v185
    %v200 = vld [vmem:[#allocation2 + $0x4] sm:$0x1]
    %v201 = vld [vmem:[#allocation5 + $0x4] sm:$0x1]
    %v202 = vmul.f32 %v201, %v114
    %v203 = vadd.f32 %v202, %v124
    %v204 = vxor.u32 %v203, 2147483648
    %v205 = vmul.f32 %v204, 1.442695
    %v206 = vpow.pop %v205
    %v207 = vadd.f32 %v206, 1.0
    %v208 = vrcp.pop %v207
    %v209 = vmul.f32 1.0, %v208
    %v210 = vmul.f32 %v140, %v209
    %v211 = vsub.f32 %v151, %v210
    %v212 = vmul.f32 %v211, %v197
    %v213 = vmul.f32 %v211, %v199
    %v214 = vadd.f32 %v213, %v200
    %v215 = vld [vmem:[#allocation2 + $0x5] sm:$0x1]
    %v216 = vld [vmem:[#allocation5 + $0x5] sm:$0x1]
    %v217 = vmul.f32 %v216, %v114
    %v218 = vadd.f32 %v217, %v124
    %v219 = vxor.u32 %v218, 2147483648
    %v220 = vmul.f32 %v219, 1.442695
    %v221 = vpow.pop %v220
    %v222 = vadd.f32 %v221, 1.0
    %v223 = vrcp.pop %v222
    %v224 = vmul.f32 1.0, %v223
    %v225 = vmul.f32 %v140, %v224
    %v226 = vsub.f32 %v151, %v225
    %v227 = vmul.f32 %v226, %v212
    %v228 = vmul.f32 %v226, %v214
    %v229 = vadd.f32 %v228, %v215
    %v230 = vld [vmem:[#allocation2 + $0x6] sm:$0x1]
    %v231 = vld [vmem:[#allocation5 + $0x6] sm:$0x1]
    %v232 = vmul.f32 %v231, %v114
    %v233 = vadd.f32 %v232, %v124
    %v234 = vxor.u32 %v233, 2147483648
    %v235 = vmul.f32 %v234, 1.442695
    %v236 = vpow.pop %v235
    %v237 = vadd.f32 %v236, 1.0
    %v238 = vrcp.pop %v237
    %v239 = vmul.f32 1.0, %v238
    %v240 = vmul.f32 %v140, %v239
    %v241 = vsub.f32 %v151, %v240
    %v242 = vmul.f32 %v241, %v227
    %v243 = vmul.f32 %v241, %v229
    %v244 = vadd.f32 %v243, %v230
    %v245 = vld [vmem:[#allocation2 + $0x7] sm:$0x1]
    %v246 = vld [vmem:[#allocation5 + $0x7] sm:$0x1]
    %v247 = vmul.f32 %v246, %v114
    %v248 = vadd.f32 %v247, %v124
    %v249 = vxor.u32 %v248, 2147483648
    %v250 = vmul.f32 %v249, 1.442695
    %v251 = vpow.pop %v250
    %v252 = vadd.f32 %v251, 1.0
    %v253 = vrcp.pop %v252
    %v254 = vmul.f32 1.0, %v253
    %v255 = vmul.f32 %v140, %v254
    %v256 = vsub.f32 %v151, %v255
    %v257 = vmul.f32 %v256, %v242
    %v258 = vmul.f32 %v256, %v244
    %v259 = vadd.f32 %v258, %v245
    %v260 = vlaneseq
    %v261 = vand.u32 %v260, 127
    loop: start=1, step=1, limit=8
    $region26: #{tpu_custom_call.1} parent=1 // loop_pre_header
      _
    $region27: #{tpu_custom_call.1} parent=1 // loop_header
      %s263 = sphi 1, %s267
      %p264 = scmp.ge.s32.totalorder %s263, 8
      %v268 = vphi 0.0, %v294
      %v269 = vphi 0.0, %v292
    $region28: #{tpu_custom_call.1} parent=1 // loop_header_branch
      %266 = sbr.rel (%p264) target = $region32
    $region29: #{tpu_custom_call.1} parent=1 // loop_body
      %v270 = vstv %s263
      %vm271 = vcmp.eq.s32.totalorder %v261, %v270
      %v272 = vsel %vm271, %v242, 0.0
      %vm273 = vcmask 57344
      %v274 = vsel %vm273, %v272, 0.0
      %275 = vadd.xlane.f32.xlu0 %v274
      %v276 = vpop.xlane.xlu0 %275
      %v277 = vsel %vm271, %v244, 0.0
      %v278 = vsel %vm273, %v277, 0.0
      %279 = vadd.xlane.f32.xlu0 %v278
      %v280 = vpop.xlane.xlu0 %279
      %v281 = vsel %vm271, %v257, 0.0
      %v282 = vsel %vm273, %v281, 0.0
      %283 = vadd.xlane.f32.xlu0 %v282
      %v284 = vpop.xlane.xlu0 %283
      %v285 = vsel %vm271, %v259, 0.0
      %v286 = vsel %vm273, %v285, 0.0
      %287 = vadd.xlane.f32.xlu0 %v286
      %v288 = vpop.xlane.xlu0 %287
      %v289 = vmul.f32 %v276, %v268
      %v290 = vadd.f32 %v289, %v280
      %v291 = vsel %vm271, %v290, 0.0
      %v292 = vadd.f32 %v269, %v291
      %v293 = vmul.f32 %v284, %v268
      %v294 = vadd.f32 %v293, %v288
    $region30: #{tpu_custom_call.1} parent=1 // loop_footer
      %s267 = sadd.s32 1, %s263
    $region31: #{tpu_custom_call.1} parent=1 // loop_footer_branch
      %262 = sbr.rel target = $region27
    $region32: #{tpu_custom_call.1} parent=1 // loop_exit
      _
    %vm295 = vcmp.ge.s32.totalorder %v261, 1
    %v296 = vsel %vm295, 1, 0
    %v297 = vcvt.s32.f32 %v296
    %299 = vset.pattern.permute.xlu0 0
    %300 = vperm.xlu0 %299, %v55
    %v301 = vpop.permute.xlu0 %300
    %v303 = vlaneseq
    %v304 = vshrl.u32 %v303, 7
    %v305 = vsub.s32 0, %v304
    %v306 = vrot.slane %v301, %v305
    %v307 = vmul.f32 %v306, %v269
    %v308 = vmul.f32 %v255, %v269
    %v309 = vmul.f32 %v297, %v306
    %v310 = vmul.f32 %v297, %v255
    %v311 = vmul.f32 %v297, %v256
    %v312 = vmul.f32 %v297, %v103
    %v314 = vrot.slane %v269, 7
    %v317 = vrot.slane %v308, 6
    %v320 = vrot.slane %v310, 4
    %v323 = vrot.slane %v311, 3
    %v326 = vrot.slane %v312, 2
    %vm328 = vcmask 1040384
    %v329 = vsel %vm328, %v307, %v314
    %vm330 = vcmask 1041408
    %v331 = vsel %vm330, %v329, %v317
    %vm332 = vcmask 1042432
    %v333 = vsel %vm332, %v331, %v309
    %vm334 = vcmask 1043456
    %v335 = vsel %vm334, %v333, %v320
    %vm336 = vcmask 1044480
    %v337 = vsel %vm336, %v335, %v323
    %vm338 = vcmask 1045504
    %v339 = vsel %vm338, %v337, %v326
    %vm340 = vcmask 1046528
    %v341 = vsel %vm340, %v339, 0.0
    %vm342 = vcmask 64512
    %343 = vst.msk [vmem:[#allocation7] sm:$0xff] %vm342, %v341
    // Predicated region
    $region33: #{tpu_custom_call.1} parent=1 // pred_check
      _
    $region34: #{tpu_custom_call.1} parent=1 // pred_check_branch
      %345 = sbr.rel (0) target = $region36
    $region35: #{tpu_custom_call.1} parent=1 // pred_region
      %s347 = ssub.s32 128, 128
      %348 = vsyncadd [#allocation4], %s347
      %s350 = sshll.u32 [#allocation7], 4
      %s351 = int_to_ptr.vmem [resolvable:$true] %s350
      %353 = dma.vmem_to_hbm [thread:$0]  %s351, 128, %s4, [#allocation4]
    $region36: #{tpu_custom_call.1} parent=1 // pred_fallthru
      _
    // Predicated region
    $region37: #{tpu_custom_call.1} parent=1 // pred_check
      _
    $region38: #{tpu_custom_call.1} parent=1 // pred_check_branch
      %355 = sbr.rel (0) target = $region40
    $region39: #{tpu_custom_call.1} parent=1 // pred_region
      %356 = dma.done [#allocation4], 128
    $region40: #{tpu_custom_call.1} parent=1 // pred_fallthru
      _
    %357 = vsyncpa [#allocation3], 1
    %358 = vsyncpa [#allocation6], 1
    %359 = vsyncpa [#allocation4], 1

</llo_original>
